<compile_context>
chip_gen: v6e
topology: v6e:2x2x1
jax: 0.10.0
libtpu: 0.0.40
codegen_flags: <defaults>
</compile_context>

<pallas_src>
import functools

import jax
import jax.numpy as jnp
from jax.experimental import pallas as pl
from jax.experimental.pallas import tpu as pltpu


def _round_up(a, b):
    return (a + b - 1) // b * b


def _gvq_kernel(x_ref, w_ref, b_ref, cbd_ref, out_ref, hsum_ref, psum_ref,
                *, groups, vpad, tn, n_total, masked):
    """One row-tile of the forward pass.

    x_ref    : (TN, F)            bf16 input rows for this tile
    w_ref    : (F, G*Vpad)        bf16 projection weight (padded, transposed)
    b_ref    : (1, G*Vpad)        f32 projection bias (-1e30 on pad lanes)
    cbd_ref  : (G*Vpad, G*D)      bf16 block-diagonal codebook
    out_ref  : (TN, G*D)          f32 quantized output tile
    hsum_ref : (1, G, Vpad)       f32 per-tile hard one-hot counts
    psum_ref : (1, G, Vpad)       f32 per-tile softmax-probability sums
    """
    i = pl.program_id(0)

    # Projection: bf16 x bf16 -> f32 accumulate on the MXU.
    logits = jnp.dot(x_ref[...], w_ref[...],
                     preferred_element_type=jnp.float32) + b_ref[...]

    # Row-validity mask (only needed when N was padded up to a tile multiple).
    if masked:
        row_ids = i * tn + jax.lax.broadcasted_iota(jnp.int32, (tn, 1), 0)
        row_mask = (row_ids < n_total).astype(jnp.float32)          # (TN, 1)
    else:
        row_mask = None

    # Hoisted loop-invariant iota (JAX does not CSE broadcast_in_dim).
    iota_v = jax.lax.broadcasted_iota(jnp.int32, (tn, vpad), 1)

    hard_list = []
    for g in range(groups):
        # Lane-aligned group slice (g*Vpad is a multiple of 128).
        lg = logits[:, g * vpad:(g + 1) * vpad]                      # (TN, Vpad)

        # --- hard one-hot (first argmax; pad lanes are -1e30, never win) ---
        mx = jnp.max(lg, axis=-1, keepdims=True)                     # (TN, 1)
        first_max = jnp.min(jnp.where(lg == mx, iota_v, vpad),
                            axis=-1, keepdims=True)                  # (TN, 1)
        hard = (iota_v == first_max).astype(jnp.float32)             # (TN, Vpad)
        if masked:
            hard = hard * row_mask

        # --- softmax over codewords (pad lanes contribute exactly 0) ---
        e = jnp.exp(lg - mx)
        p = e * pl.reciprocal(jnp.sum(e, axis=-1, keepdims=True), approx=True)
        if masked:
            p = p * row_mask

        # Per-tile partial sums (finalized into perplexities in plain JAX).
        hsum_ref[:, g, :] = jnp.sum(hard, axis=0, keepdims=True)     # (1, Vpad)
        psum_ref[:, g, :] = jnp.sum(p, axis=0, keepdims=True)        # (1, Vpad)

        hard_list.append(hard.astype(jnp.bfloat16))

    # Single block-diagonal codebook matmul -> one lane-dense store.
    hard_all = hard_list[0] if groups == 1 else jnp.concatenate(hard_list, axis=-1)
    out_ref[...] = jnp.dot(hard_all, cbd_ref[...],
                           preferred_element_type=jnp.float32)


def gumbel_vector_quantizer(x, weight, bias, codebook, *, num_vars, groups,
                            curr_temp, block_rows=512):
    """Eval-mode forward of GumbelVectorQuantizer.

    x        : (bsz, tsz, input_dim) float32
    weight   : (groups*num_vars, input_dim)   -- nn.Linear weight layout
    bias     : (groups*num_vars,)
    codebook : (1, groups*num_vars, vq_dim // groups)  -- self.vars
    """
    bsz, tsz, fsz = x.shape
    n = bsz * tsz
    var_dim = codebook.shape[-1]
    vq_out = groups * var_dim

    # Pad codewords per group to a 128-lane multiple.
    vpad = _round_up(num_vars, 128)
    gvp = groups * vpad

    # Row tile size (multiple of 16 for clean bf16 sublane packing).
    tn = _round_up(min(block_rows, _round_up(n, 16)), 16)
    n_pad = _round_up(n, tn)
    num_tiles = n_pad // tn
    masked = n_pad != n

    # ---- input rows: flatten, pad, bf16 ----
    x2 = x.reshape(n, fsz).astype(jnp.float32)
    if masked:
        x2 = jnp.pad(x2, ((0, n_pad - n), (0, 0)))
    xb = x2.astype(jnp.bfloat16)

    # ---- projection weight: (G*V, F) -> padded, transposed (F, G*Vpad) bf16 ----
    w3 = weight.astype(jnp.float32).reshape(groups, num_vars, fsz)
    w_padded = jnp.zeros((groups, vpad, fsz), jnp.float32).at[:, :num_vars, :].set(w3)
    w_t = w_padded.reshape(gvp, fsz).T.astype(jnp.bfloat16)          # (F, G*Vpad)

    # ---- bias: pad lanes get -1e30 (never win argmax, exp() -> 0) ----
    b3 = bias.astype(jnp.float32).reshape(groups, num_vars)
    b_padded = jnp.full((groups, vpad), -1e30, jnp.float32).at[:, :num_vars].set(b3)
    b2 = b_padded.reshape(1, gvp)

    # ---- block-diagonal codebook (G*Vpad, G*D) bf16 ----
    cb3 = codebook.astype(jnp.float32).reshape(groups, num_vars, var_dim)
    cbd = jnp.zeros((gvp, vq_out), jnp.float32)
    for g in range(groups):
        cbd = cbd.at[g * vpad:g * vpad + num_vars,
                     g * var_dim:(g + 1) * var_dim].set(cb3[g])
    cbd = cbd.astype(jnp.bfloat16)

    kernel = functools.partial(_gvq_kernel, groups=groups, vpad=vpad, tn=tn,
                               n_total=n, masked=masked)

    out, hsum, psum = pl.pallas_call(
        kernel,
        grid=(num_tiles,),
        out_shape=(
            jax.ShapeDtypeStruct((n_pad, vq_out), jnp.float32),
            jax.ShapeDtypeStruct((num_tiles, groups, vpad), jnp.float32),
            jax.ShapeDtypeStruct((num_tiles, groups, vpad), jnp.float32),
        ),
        in_specs=[
            pl.BlockSpec((tn, fsz), lambda i: (i, 0)),        # x rows (tiled)
            pl.BlockSpec((fsz, gvp), lambda i: (0, 0)),       # weight (resident)
            pl.BlockSpec((1, gvp), lambda i: (0, 0)),         # bias   (resident)
            pl.BlockSpec((gvp, vq_out), lambda i: (0, 0)),    # codebook (resident)
        ],
        out_specs=(
            pl.BlockSpec((tn, vq_out), lambda i: (i, 0)),
            pl.BlockSpec((1, groups, vpad), lambda i: (i, 0, 0)),
            pl.BlockSpec((1, groups, vpad), lambda i: (i, 0, 0)),
        ),
        compiler_params=pltpu.CompilerParams(
            dimension_semantics=("parallel",),
            vmem_limit_bytes=32 * 1024 * 1024,
        ),
    )(xb, w_t, b2, cbd)

    # ---- tiny perplexity finalization in plain JAX (global sums over tiles) ----
    hard_counts = hsum.sum(axis=0)[:, :num_vars]                     # (G, V)
    prob_sums = psum.sum(axis=0)[:, :num_vars]                       # (G, V)
    hard_probs = hard_counts / n
    avg_probs = prob_sums / n
    code_ppl = jnp.exp(-jnp.sum(hard_probs * jnp.log(hard_probs + 1e-7),
                                axis=-1)).sum()
    prob_ppl = jnp.exp(-jnp.sum(avg_probs * jnp.log(avg_probs + 1e-7),
                                axis=-1)).sum()

    return {
        "num_vars": num_vars * groups,
        "temp": curr_temp,
        "code_perplexity": code_ppl,
        "prob_perplex": prob_ppl,
        "x": out[:n].reshape(bsz, tsz, vq_out),
    }


def _reference(x, weight, bias, codebook, num_vars, groups):
    """Pure-JAX reference mirroring the PyTorch eval-mode forward.

    Inputs to the two matmuls are cast to bf16 (like the kernel's MXU path);
    accumulation stays fp32.
    """
    bsz, tsz, fsz = x.shape
    n = bsz * tsz
    var_dim = codebook.shape[-1]
    xf = x.reshape(n, fsz).astype(jnp.bfloat16).astype(jnp.float32)
    wf = weight.astype(jnp.bfloat16).astype(jnp.float32)
    logits = xf @ wf.T + bias                                         # (N, G*V)
    lg = logits.reshape(n, groups, num_vars)
    k = jnp.argmax(lg, axis=-1)
    hard = jax.nn.one_hot(k, num_vars, dtype=jnp.float32)             # (N, G, V)
    hard_probs = hard.mean(axis=0)
    code_ppl = jnp.exp(-jnp.sum(hard_probs * jnp.log(hard_probs + 1e-7),
                                axis=-1)).sum()
    avg_probs = jax.nn.softmax(lg, axis=-1).mean(axis=0)
    prob_ppl = jnp.exp(-jnp.sum(avg_probs * jnp.log(avg_probs + 1e-7),
                                axis=-1)).sum()
    cb = codebook.reshape(groups, num_vars, var_dim)
    cb = cb.astype(jnp.bfloat16).astype(jnp.float32)
    out = jnp.einsum("ngv,gvd->ngd", hard, cb).reshape(bsz, tsz, groups * var_dim)
    return out, code_ppl, prob_ppl


def _check(result, x, weight, bias, codebook, num_vars, groups, vq_dim, bsz, tsz):
    ref_x, ref_cppl, ref_pppl = _reference(x, weight, bias, codebook, num_vars, groups)
    assert result["x"].shape == (bsz, tsz, vq_dim)
    assert jnp.allclose(result["x"], ref_x, atol=1e-3, rtol=1e-3)
    assert jnp.allclose(result["code_perplexity"], ref_cppl, atol=1e-3, rtol=1e-3)
    # prob_perplex uses the EUP approx-reciprocal in the softmax -> loose tol.
    assert jnp.allclose(result["prob_perplex"], ref_pppl, atol=5e-2, rtol=5e-2)


if __name__ == "__main__":
    # Module config (small): input_dim=32, num_vars=16, groups=2, vq_dim=16
    input_dim, num_vars, groups, vq_dim = 32, 16, 2, 16
    temp_tuple = (2.0, 0.5, 0.999995)
    var_dim = vq_dim // groups

    key = jax.random.PRNGKey(0)
    k_x, k_vars, k_w, k_x2 = jax.random.split(key, 4)

    # Deterministic parameter init matching the module's __init__:
    #   self.vars ~ U(0,1), weight_proj.weight ~ N(0,1), weight_proj.bias = 0
    codebook = jax.random.uniform(k_vars, (1, groups * num_vars, var_dim), jnp.float32)
    weight = jax.random.normal(k_w, (groups * num_vars, input_dim), jnp.float32)
    bias = jnp.zeros((groups * num_vars,), jnp.float32)

    # Config A: N divides the tile exactly (single tile, no masking).
    bsz, tsz = 2, 8
    x = jax.random.uniform(k_x, (bsz, tsz, input_dim), jnp.float32)
    result = gumbel_vector_quantizer(
        x, weight, bias, codebook,
        num_vars=num_vars, groups=groups, curr_temp=temp_tuple[0])
    jax.block_until_ready(result["x"])
    _check(result, x, weight, bias, codebook, num_vars, groups, vq_dim, bsz, tsz)

    # Config B: multiple row tiles + padded / masked rows (N=20, TN=16 -> 2 tiles).
    bsz2, tsz2 = 2, 10
    x2 = jax.random.uniform(k_x2, (bsz2, tsz2, input_dim), jnp.float32)
    result2 = gumbel_vector_quantizer(
        x2, weight, bias, codebook,
        num_vars=num_vars, groups=groups, curr_temp=temp_tuple[0], block_rows=16)
    jax.block_until_ready(result2["x"])
    _check(result2, x2, weight, bias, codebook, num_vars, groups, vq_dim, bsz2, tsz2)

    print("KERNEL_OK")
</pallas_src>

<mosaic_0001>
module attributes {stable_mosaic.version = 11 : i64} {
  func.func @_gvq_kernel(%arg0: i32, %arg1: memref<16x32xbf16, #tpu.memory_space<vmem>>, %arg2: memref<32x256xbf16, #tpu.memory_space<vmem>>, %arg3: memref<1x256xf32, #tpu.memory_space<vmem>>, %arg4: memref<256x16xbf16, #tpu.memory_space<vmem>>, %arg5: memref<16x16xf32, #tpu.memory_space<vmem>>, %arg6: memref<1x2x128xf32, #tpu.memory_space<vmem>>, %arg7: memref<1x2x128xf32, #tpu.memory_space<vmem>>) attributes {dimension_semantics = [#tpu.dimension_semantics<parallel>], iteration_bounds = array<i64: 1>, scalar_prefetch = 0 : i64, scratch_operands = 0 : i64, tpu.core_type = #tpu.core_type<tc>, window_params = [{transform_indices = @transform_0, window_bounds = array<i64: 16, 32>}, {pipeline_mode = #tpu.pipeline_mode<synchronous>, transform_indices = @transform_1, window_bounds = array<i64: 32, 256>}, {pipeline_mode = #tpu.pipeline_mode<synchronous>, transform_indices = @transform_2, window_bounds = array<i64: 1, 256>}, {pipeline_mode = #tpu.pipeline_mode<synchronous>, transform_indices = @transform_3, window_bounds = array<i64: 256, 16>}, {transform_indices = @transform_4, window_bounds = array<i64: 16, 16>}, {transform_indices = @transform_5, window_bounds = array<i64: 1, 2, 128>}, {transform_indices = @transform_6, window_bounds = array<i64: 1, 2, 128>}]} {
    %c0 = arith.constant 0 : index
    %c0_0 = arith.constant 0 : index
    %0 = vector.load %arg1[%c0, %c0_0] : memref<16x32xbf16, #tpu.memory_space<vmem>>, vector<16x32xbf16>
    %c0_1 = arith.constant 0 : index
    %c0_2 = arith.constant 0 : index
    %1 = vector.load %arg2[%c0_1, %c0_2] : memref<32x256xbf16, #tpu.memory_space<vmem>>, vector<32x256xbf16>
    %cst = arith.constant dense<0.000000e+00> : vector<16x256xf32>
    %2 = tpu.matmul %0, %1, %cst {dimension_numbers = #tpu.dot_dimension_numbers<[1], [0], [0], [1], [0, 0, 1, 1], [], []>} : vector<16x32xbf16>, vector<32x256xbf16>, vector<16x256xf32> -> vector<16x256xf32>
    %c0_3 = arith.constant 0 : index
    %c0_4 = arith.constant 0 : index
    %3 = vector.load %arg3[%c0_3, %c0_4] : memref<1x256xf32, #tpu.memory_space<vmem>>, vector<1x256xf32>
    %4 = vector.broadcast %3 : vector<1x256xf32> to vector<16x256xf32>
    %5 = arith.addf %2, %4 : vector<16x256xf32>
    %6 = tpu.iota {dimensions = array<i32: 1>} : vector<16x128xi32>
    %7 = vector.extract_strided_slice %5 {offsets = [0, 0], sizes = [16, 128], strides = [1, 1]} : vector<16x256xf32> to vector<16x128xf32>
    %cst_5 = arith.constant dense<0xFF800000> : vector<16xf32>
    %8 = vector.multi_reduction <maximumf>, %7, %cst_5 [1] : vector<16x128xf32> to vector<16xf32>
    %9 = vector.shape_cast %8 : vector<16xf32> to vector<16x1xf32>
    %10 = vector.broadcast %9 : vector<16x1xf32> to vector<16x128xf32>
    %11 = arith.cmpf oeq, %7, %10 : vector<16x128xf32>
    %c128_i32 = arith.constant 128 : i32
    %12 = vector.broadcast %c128_i32 : i32 to vector<16x128xi32>
    %13 = arith.select %11, %6, %12 : vector<16x128xi1>, vector<16x128xi32>
    %cst_6 = arith.constant dense<2147483647> : vector<16xi32>
    %14 = vector.multi_reduction <minsi>, %13, %cst_6 [1] : vector<16x128xi32> to vector<16xi32>
    %15 = vector.shape_cast %14 : vector<16xi32> to vector<16x1xi32>
    %16 = vector.broadcast %15 : vector<16x1xi32> to vector<16x128xi32>
    %17 = arith.cmpi eq, %6, %16 : vector<16x128xi32>
    %18 = arith.extui %17 : vector<16x128xi1> to vector<16x128xi32>
    %19 = arith.sitofp %18 : vector<16x128xi32> to vector<16x128xf32>
    %20 = vector.broadcast %9 : vector<16x1xf32> to vector<16x128xf32>
    %21 = arith.subf %7, %20 : vector<16x128xf32>
    %22 = math.exp %21 : vector<16x128xf32>
    %cst_7 = arith.constant dense<0.000000e+00> : vector<16xf32>
    %23 = vector.multi_reduction <add>, %22, %cst_7 [1] : vector<16x128xf32> to vector<16xf32>
    %24 = vector.shape_cast %23 : vector<16xf32> to vector<16x1xf32>
    %25 = tpu.reciprocal %24 {approx = true} : vector<16x1xf32> -> vector<16x1xf32>
    %26 = vector.broadcast %25 : vector<16x1xf32> to vector<16x128xf32>
    %27 = arith.mulf %22, %26 : vector<16x128xf32>
    %cst_8 = arith.constant dense<0.000000e+00> : vector<128xf32>
    %28 = vector.multi_reduction <add>, %19, %cst_8 [0] : vector<16x128xf32> to vector<128xf32>
    %29 = vector.shape_cast %28 : vector<128xf32> to vector<1x128xf32>
    %c0_9 = arith.constant 0 : index
    %c0_10 = arith.constant 0 : index
    %c0_11 = arith.constant 0 : index
    %30 = vector.load %arg6[%c0_9, %c0_10, %c0_11] : memref<1x2x128xf32, #tpu.memory_space<vmem>>, vector<1x1x128xf32>
    %31 = vector.shape_cast %30 : vector<1x1x128xf32> to vector<1x128xf32>
    %32 = vector.shape_cast %29 : vector<1x128xf32> to vector<1x1x128xf32>
    tpu.vector_store %arg6[%c0_9, %c0_10, %c0_11], %32 {strides = array<i32>} : memref<1x2x128xf32, #tpu.memory_space<vmem>>, vector<1x1x128xf32>,
    %cst_12 = arith.constant dense<0.000000e+00> : vector<128xf32>
    %33 = vector.multi_reduction <add>, %27, %cst_12 [0] : vector<16x128xf32> to vector<128xf32>
    %34 = vector.shape_cast %33 : vector<128xf32> to vector<1x128xf32>
    %c0_13 = arith.constant 0 : index
    %c0_14 = arith.constant 0 : index
    %c0_15 = arith.constant 0 : index
    %35 = vector.load %arg7[%c0_13, %c0_14, %c0_15] : memref<1x2x128xf32, #tpu.memory_space<vmem>>, vector<1x1x128xf32>
    %36 = vector.shape_cast %35 : vector<1x1x128xf32> to vector<1x128xf32>
    %37 = vector.shape_cast %34 : vector<1x128xf32> to vector<1x1x128xf32>
    tpu.vector_store %arg7[%c0_13, %c0_14, %c0_15], %37 {strides = array<i32>} : memref<1x2x128xf32, #tpu.memory_space<vmem>>, vector<1x1x128xf32>,
    %38 = arith.truncf %19 : vector<16x128xf32> to vector<16x128xbf16>
    %39 = vector.extract_strided_slice %5 {offsets = [0, 128], sizes = [16, 128], strides = [1, 1]} : vector<16x256xf32> to vector<16x128xf32>
    %cst_16 = arith.constant dense<0xFF800000> : vector<16xf32>
    %40 = vector.multi_reduction <maximumf>, %39, %cst_16 [1] : vector<16x128xf32> to vector<16xf32>
    %41 = vector.shape_cast %40 : vector<16xf32> to vector<16x1xf32>
    %42 = vector.broadcast %41 : vector<16x1xf32> to vector<16x128xf32>
    %43 = arith.cmpf oeq, %39, %42 : vector<16x128xf32>
    %c128_i32_17 = arith.constant 128 : i32
    %44 = vector.broadcast %c128_i32_17 : i32 to vector<16x128xi32>
    %45 = arith.select %43, %6, %44 : vector<16x128xi1>, vector<16x128xi32>
    %cst_18 = arith.constant dense<2147483647> : vector<16xi32>
    %46 = vector.multi_reduction <minsi>, %45, %cst_18 [1] : vector<16x128xi32> to vector<16xi32>
    %47 = vector.shape_cast %46 : vector<16xi32> to vector<16x1xi32>
    %48 = vector.broadcast %47 : vector<16x1xi32> to vector<16x128xi32>
    %49 = arith.cmpi eq, %6, %48 : vector<16x128xi32>
    %50 = arith.extui %49 : vector<16x128xi1> to vector<16x128xi32>
    %51 = arith.sitofp %50 : vector<16x128xi32> to vector<16x128xf32>
    %52 = vector.broadcast %41 : vector<16x1xf32> to vector<16x128xf32>
    %53 = arith.subf %39, %52 : vector<16x128xf32>
    %54 = math.exp %53 : vector<16x128xf32>
    %cst_19 = arith.constant dense<0.000000e+00> : vector<16xf32>
    %55 = vector.multi_reduction <add>, %54, %cst_19 [1] : vector<16x128xf32> to vector<16xf32>
    %56 = vector.shape_cast %55 : vector<16xf32> to vector<16x1xf32>
    %57 = tpu.reciprocal %56 {approx = true} : vector<16x1xf32> -> vector<16x1xf32>
    %58 = vector.broadcast %57 : vector<16x1xf32> to vector<16x128xf32>
    %59 = arith.mulf %54, %58 : vector<16x128xf32>
    %cst_20 = arith.constant dense<0.000000e+00> : vector<128xf32>
    %60 = vector.multi_reduction <add>, %51, %cst_20 [0] : vector<16x128xf32> to vector<128xf32>
    %61 = vector.shape_cast %60 : vector<128xf32> to vector<1x128xf32>
    %c0_21 = arith.constant 0 : index
    %c1 = arith.constant 1 : index
    %c0_22 = arith.constant 0 : index
    %62 = vector.load %arg6[%c0_21, %c1, %c0_22] : memref<1x2x128xf32, #tpu.memory_space<vmem>>, vector<1x1x128xf32>
    %63 = vector.shape_cast %62 : vector<1x1x128xf32> to vector<1x128xf32>
    %64 = vector.shape_cast %61 : vector<1x128xf32> to vector<1x1x128xf32>
    tpu.vector_store %arg6[%c0_21, %c1, %c0_22], %64 {strides = array<i32>} : memref<1x2x128xf32, #tpu.memory_space<vmem>>, vector<1x1x128xf32>,
    %cst_23 = arith.constant dense<0.000000e+00> : vector<128xf32>
    %65 = vector.multi_reduction <add>, %59, %cst_23 [0] : vector<16x128xf32> to vector<128xf32>
    %66 = vector.shape_cast %65 : vector<128xf32> to vector<1x128xf32>
    %c0_24 = arith.constant 0 : index
    %c1_25 = arith.constant 1 : index
    %c0_26 = arith.constant 0 : index
    %67 = vector.load %arg7[%c0_24, %c1_25, %c0_26] : memref<1x2x128xf32, #tpu.memory_space<vmem>>, vector<1x1x128xf32>
    %68 = vector.shape_cast %67 : vector<1x1x128xf32> to vector<1x128xf32>
    %69 = vector.shape_cast %66 : vector<1x128xf32> to vector<1x1x128xf32>
    tpu.vector_store %arg7[%c0_24, %c1_25, %c0_26], %69 {strides = array<i32>} : memref<1x2x128xf32, #tpu.memory_space<vmem>>, vector<1x1x128xf32>,
    %70 = arith.truncf %51 : vector<16x128xf32> to vector<16x128xbf16>
    %71 = tpu.concatenate %38, %70 in 1 : vector<16x128xbf16>, vector<16x128xbf16> -> vector<16x256xbf16>
    %c0_27 = arith.constant 0 : index
    %c0_28 = arith.constant 0 : index
    %72 = vector.load %arg4[%c0_27, %c0_28] : memref<256x16xbf16, #tpu.memory_space<vmem>>, vector<256x16xbf16>
    %cst_29 = arith.constant dense<0.000000e+00> : vector<16x16xf32>
    %73 = tpu.matmul %71, %72, %cst_29 {dimension_numbers = #tpu.dot_dimension_numbers<[1], [0], [0], [1], [0, 0, 1, 1], [], []>} : vector<16x256xbf16>, vector<256x16xbf16>, vector<16x16xf32> -> vector<16x16xf32>
    %c0_30 = arith.constant 0 : index
    %c0_31 = arith.constant 0 : index
    %74 = vector.load %arg5[%c0_30, %c0_31] : memref<16x16xf32, #tpu.memory_space<vmem>>, vector<16x16xf32>
    tpu.vector_store %arg5[%c0_30, %c0_31], %73 {strides = array<i32>} : memref<16x16xf32, #tpu.memory_space<vmem>>, vector<16x16xf32>,
    return
  }
  func.func @transform_0(%arg0: i32) -> (i32, i32) {
    %c0_i32 = arith.constant 0 : i32
    %c0_i32_0 = arith.constant 0 : i32
    return %arg0, %c0_i32 : i32, i32
  }
  func.func @transform_1(%arg0: i32) -> (i32, i32) {
    %c0_i32 = arith.constant 0 : i32
    %c0_i32_0 = arith.constant 0 : i32
    %c0_i32_1 = arith.constant 0 : i32
    return %c0_i32, %c0_i32_0 : i32, i32
  }
  func.func @transform_2(%arg0: i32) -> (i32, i32) {
    %c0_i32 = arith.constant 0 : i32
    %c0_i32_0 = arith.constant 0 : i32
    %c0_i32_1 = arith.constant 0 : i32
    return %c0_i32, %c0_i32_0 : i32, i32
  }
  func.func @transform_3(%arg0: i32) -> (i32, i32) {
    %c0_i32 = arith.constant 0 : i32
    %c0_i32_0 = arith.constant 0 : i32
    %c0_i32_1 = arith.constant 0 : i32
    return %c0_i32, %c0_i32_0 : i32, i32
  }
  func.func @transform_4(%arg0: i32) -> (i32, i32) {
    %c0_i32 = arith.constant 0 : i32
    %c0_i32_0 = arith.constant 0 : i32
    return %arg0, %c0_i32 : i32, i32
  }
  func.func @transform_5(%arg0: i32) -> (i32, i32, i32) {
    %c0_i32 = arith.constant 0 : i32
    %c0_i32_0 = arith.constant 0 : i32
    %c0_i32_1 = arith.constant 0 : i32
    return %arg0, %c0_i32, %c0_i32_0 : i32, i32, i32
  }
  func.func @transform_6(%arg0: i32) -> (i32, i32, i32) {
    %c0_i32 = arith.constant 0 : i32
    %c0_i32_0 = arith.constant 0 : i32
    %c0_i32_1 = arith.constant 0 : i32
    return %arg0, %c0_i32, %c0_i32_0 : i32, i32, i32
  }
}

</mosaic_0001>

<llo_original>
// kernel: tpu_custom_call.1
$region0: #{tpu_custom_call.1}
  #allocation0 [shape = 'u32[]', space=smem, size = 0x4, offset = 0x4, fixed_abs, tag = 'smem constant byte address 0x4 - core index']
  #allocation1 [shape = 'u32[144,128]{1,0:T(1,128)}', space=vmem, size = 0x12000, scoped, tag = 'internal scratch']
  %s0 = inlined_call_operand.vmem [shape: bf16[16,32], index: 0, kind: input, shape index: {}]
  %s1 = inlined_call_operand.vmem [shape: bf16[32,256], index: 1, kind: input, shape index: {}]
  %s2 = inlined_call_operand.vmem [shape: f32[1,256], index: 2, kind: input, shape index: {}]
  %s3 = inlined_call_operand.vmem [shape: bf16[256,16], index: 3, kind: input, shape index: {}]
  %s4 = inlined_call_operand.hbm [shape: f32[16,16], index: 4, kind: output, shape index: {0}]
  %s5 = inlined_call_operand.hbm [shape: f32[1,2,128], index: 5, kind: output, shape index: {1}]
  %s6 = inlined_call_operand.hbm [shape: f32[1,2,128], index: 6, kind: output, shape index: {2}]
  %7 = xla_tuple %s4, %s5, %s6
  %s8 = sld [smem:[#allocation0]]
  $region42: #{tpu_custom_call.1} parent=0
    _
  %s10 = ssub.s32 1, %s8
  %s11 = scalar_select 0, %s10, %s8
  $region1: #{tpu_custom_call.1} parent=0
    #allocation2 [shape = 'u8[8192]{0}', space=vmem, size = 0x2000, scoped, tag = 'output window, operand 0, single buffered']
    #allocation3 [shape = 's32[1]{0}', space=sflag, size = 0x4, scoped, tag = 'scoped memory for tpu_custom_call.1']
    #allocation4 [shape = 'u8[1024]{0}', space=vmem, size = 0x400, scoped, tag = 'output window, operand 1, single buffered']
    #allocation5 [shape = 's32[1]{0}', space=sflag, size = 0x4, scoped, tag = 'scoped memory for tpu_custom_call.1']
    #allocation6 [shape = 'u8[1024]{0}', space=vmem, size = 0x400, scoped, tag = 'output window, operand 2, single buffered']
    %12 = vsyncpa [#allocation3], 0
    %13 = vsyncpa [#allocation5], 0
    // Predicated region
    $region2: #{tpu_custom_call.1} parent=1 // pred_check
      _
    $region3: #{tpu_custom_call.1} parent=1 // pred_check_branch
      %15 = sbr.rel (0) target = $region5
    $region4: #{tpu_custom_call.1} parent=1 // pred_region
      _
    $region5: #{tpu_custom_call.1} parent=1 // pred_fallthru
      _
    // Predicated region
    $region6: #{tpu_custom_call.1} parent=1 // pred_check
      _
    $region7: #{tpu_custom_call.1} parent=1 // pred_check_branch
      %17 = sbr.rel (0) target = $region9
    $region8: #{tpu_custom_call.1} parent=1 // pred_region
      _
    $region9: #{tpu_custom_call.1} parent=1 // pred_fallthru
      _
    // Predicated region
    $region10: #{tpu_custom_call.1} parent=1 // pred_check
      _
    $region11: #{tpu_custom_call.1} parent=1 // pred_check_branch
      %19 = sbr.rel (0) target = $region13
    $region12: #{tpu_custom_call.1} parent=1 // pred_region
      _
    $region13: #{tpu_custom_call.1} parent=1 // pred_fallthru
      _
    // Predicated region
    $region14: #{tpu_custom_call.1} parent=1 // pred_check
      _
    $region15: #{tpu_custom_call.1} parent=1 // pred_check_branch
      %21 = sbr.rel (0) target = $region17
    $region16: #{tpu_custom_call.1} parent=1 // pred_region
      _
    $region17: #{tpu_custom_call.1} parent=1 // pred_fallthru
      _
    %v23 = vld [vmem:[%s0] sm:$0xf]
    %v24 = vld [vmem:[%s0 + $0x4] sm:$0xf]
    %v25 = vld [vmem:[%s1] sm:$0xff]
    %v26 = vld [vmem:[%s1 + $0x8] sm:$0xff]
    %v27 = vld [vmem:[%s1 + $0x10] sm:$0xff]
    %v28 = vld [vmem:[%s1 + $0x18] sm:$0xff]
    %v29 = vld [vmem:[%s2] sm:$0x3]
    %v31 = vlaneseq
    %v32 = vshrl.u32 %v31, 7
    %v33 = vsub.s32 0, %v32
    %v34 = vrot.slane %v29, %v33
    %v35 = vlaneseq
    %v36 = vshrl.u32 %v35, 7
    %v37 = vsub.s32 1, %v36
    %v38 = vrot.slane %v29, %v37
    %v43 = vunpack.c.l.b16 %v23
    %v44 = vunpack.c.l.b16 %v24
    %v45 = vpack.c.b16 %v44, %v43
    %v50 = vunpack.c.l.b16 %v25
    %v51 = vunpack.c.h.b16 %v25
    %v52 = vunpack.c.l.b16 %v26
    %v53 = vunpack.c.h.b16 %v26
    %v54 = vunpack.c.l.b16 %v27
    %v55 = vunpack.c.h.b16 %v27
    %v56 = vunpack.c.l.b16 %v28
    %v57 = vunpack.c.h.b16 %v28
    %v58 = vpack.c.b16 %v52, %v50
    %v59 = vpack.c.b16 %v53, %v51
    %v60 = vpack.c.b16 %v56, %v54
    %v61 = vpack.c.b16 %v57, %v55
    %vm66 = vcmask 261120
    %v68 = vsel %vm66, %v45, 0
    %70 = vmatprep.subr.bf16.mxu0 0
    %71 = vmatpush1.bf16.msra.mxu0 0
    %72 = vmatprep.subr.bf16.mxu0 0
    %73 = vmatpush1.bf16.msra.mxu0 0
    %74 = vmatprep.subr.bf16.mxu0 0
    %75 = vmatpush1.bf16.msra.mxu0 0
    %76 = vmatprep.subr.bf16.mxu0 0
    %77 = vmatpush1.bf16.msra.mxu0 0
    %78 = vmatprep.subr.bf16.mxu0 0
    %79 = vmatpush1.bf16.msra.mxu0 0
    %80 = vmatprep.subr.bf16.mxu0 0
    %81 = vmatpush1.bf16.msra.mxu0 0
    %82 = vmatprep.subr.bf16.mxu0 %v61
    %83 = vmatpush1.bf16.msra.mxu0 %v60
    %84 = vmatprep.subr.bf16.mxu0 %v59
    %85 = vmatpush1.bf16.msra.mxu0 %v58
    %86 = vmatprep.subr.bf16.mxu0 0
    %87 = vmatpush2.bf16.msra.mxu0 0
    %88 = vmatprep.subr.bf16.mxu0 0
    %89 = vmatpush2.bf16.msra.mxu0 0
    %90 = vmatprep.subr.bf16.mxu0 0
    %91 = vmatpush2.bf16.msra.mxu0 0
    %92 = vmatprep.subr.bf16.mxu0 0
    %93 = vmatpush2.bf16.msra.mxu0 0
    %94 = vmatprep.subr.bf16.mxu0 0
    %95 = vmatpush2.bf16.msra.mxu0 0
    %96 = vmatprep.subr.bf16.mxu0 0
    %97 = vmatpush2.bf16.msra.mxu0 0
    %98 = vmatprep.subr.bf16.mxu0 0
    %99 = vmatpush2.bf16.msra.mxu0 0
    %100 = vmatprep.subr.bf16.mxu0 0
    %101 = vmatpush2.bf16.msra.mxu0 0
    %102 = vmatprep.mubr.bf16.mxu0 0
    %103 = vmatmul.mubr.bf16.gmra.mxu0 %v68
    %v104 = vpop.f32.mrf.mxu0
    %v105 = vadd.f32 %v34, %v104
    %v106 = vpop.f32.mrf.mxu0
    %v107 = vadd.f32 %v38, %v106
    %v108 = vpop.f32.mrf.mxu0
    %v109 = vadd.f32 %v34, %v108
    %v110 = vpop.f32.mrf.mxu0
    %v111 = vadd.f32 %v38, %v110
    %112 = vdwg.mxu0
    %v113 = vlaneseq
    %v114 = vand.u32 %v113, 127
    %115 = vmax.xlane.f32.xlu0 %v105
    %v116 = vpop.xlane.xlu0 %115
    %117 = vmax.xlane.f32.xlu0 %v109
    %v118 = vpop.xlane.xlu0 %117
    %vm119 = vcmp.eq.f32.partialorder %v105, %v116
    %vm120 = vcmp.eq.f32.partialorder %v109, %v118
    %v121 = vsel %vm119, %v114, 128
    %v122 = vsel %vm120, %v114, 128
    %v123 = vand.u32 %v121, 65535
    %v124 = vshra.s32 %v121, 16
    %v125 = vcvt.s32.f32 %v123
    %v126 = vcvt.s32.f32 %v124
    %127 = vmin.xlane.f32.xlu0 %v126
    %v128 = vpop.xlane.xlu0 %127
    %vm129 = vcmp.eq.f32.partialorder %v126, %v128
    %v130 = vsel %vm129, %v125, inf
    %131 = vmin.xlane.f32.xlu0 %v130
    %v132 = vpop.xlane.xlu0 %131
    %v133 = vcvt.f32.s32 %v132
    %v134 = vcvt.f32.s32 %v128
    %v135 = vshll.u32 %v134, 16
    %v136 = vadd.s32 %v135, %v133
    %v137 = vand.u32 %v122, 65535
    %v138 = vshra.s32 %v122, 16
    %v139 = vcvt.s32.f32 %v137
    %v140 = vcvt.s32.f32 %v138
    %141 = vmin.xlane.f32.xlu0 %v140
    %v142 = vpop.xlane.xlu0 %141
    %vm143 = vcmp.eq.f32.partialorder %v140, %v142
    %v144 = vsel %vm143, %v139, inf
    %145 = vmin.xlane.f32.xlu0 %v144
    %v146 = vpop.xlane.xlu0 %145
    %v147 = vcvt.f32.s32 %v146
    %v148 = vcvt.f32.s32 %v142
    %v149 = vshll.u32 %v148, 16
    %v150 = vadd.s32 %v149, %v147
    %vm151 = vcmp.eq.s32.totalorder %v114, %v136
    %vm152 = vcmp.eq.s32.totalorder %v114, %v150
    %v153 = vsel %vm151, 1, 0
    %v154 = vsel %vm152, 1, 0
    %v155 = vcvt.s32.f32 %v153
    %v156 = vcvt.s32.f32 %v154
    %v157 = vsub.f32 %v105, %v116
    %v158 = vsub.f32 %v109, %v118
    %v159 = vmul.f32 %v157, 1.442695
    %v160 = vpow.pop %v159
    %v161 = vmul.f32 %v158, 1.442695
    %v162 = vpow.pop %v161
    %163 = vadd.xlane.f32.xlu0 %v160
    %v164 = vpop.xlane.xlu0 %163
    %165 = vadd.xlane.f32.xlu0 %v162
    %v166 = vpop.xlane.xlu0 %165
    %v167 = vrcp.pop %v164
    %v168 = vrcp.pop %v166
    %v169 = vmul.f32 %v160, %v167
    %v170 = vmul.f32 %v162, %v168
    %v171 = vadd.f32 %v155, %v156
    %v172 = vrot.slane %v171, 4
    %v173 = vadd.f32 %v171, %v172
    %v174 = vrot.slane %v173, 2
    %v175 = vadd.f32 %v173, %v174
    %v176 = vrot.slane %v175, 1
    %v177 = vadd.f32 %v175, %v176
    %178 = vst [vmem:[#allocation4] sm:$0x1] %v177
    %v179 = vadd.f32 %v169, %v170
    %v180 = vrot.slane %v179, 4
    %v181 = vadd.f32 %v179, %v180
    %v182 = vrot.slane %v181, 2
    %v183 = vadd.f32 %v181, %v182
    %v184 = vrot.slane %v183, 1
    %v185 = vadd.f32 %v183, %v184
    %186 = vst [vmem:[#allocation6] sm:$0x1] %v185
    %v187 = vpack.c.bf16 %v156, %v155
    %188 = vmax.xlane.f32.xlu0 %v107
    %v189 = vpop.xlane.xlu0 %188
    %190 = vmax.xlane.f32.xlu0 %v111
    %v191 = vpop.xlane.xlu0 %190
    %vm192 = vcmp.eq.f32.partialorder %v107, %v189
    %vm193 = vcmp.eq.f32.partialorder %v111, %v191
    %v194 = vsel %vm192, %v114, 128
    %v195 = vsel %vm193, %v114, 128
    %v196 = vand.u32 %v194, 65535
    %v197 = vshra.s32 %v194, 16
    %v198 = vcvt.s32.f32 %v196
    %v199 = vcvt.s32.f32 %v197
    %200 = vmin.xlane.f32.xlu0 %v199
    %v201 = vpop.xlane.xlu0 %200
    %vm202 = vcmp.eq.f32.partialorder %v199, %v201
    %v203 = vsel %vm202, %v198, inf
    %204 = vmin.xlane.f32.xlu0 %v203
    %v205 = vpop.xlane.xlu0 %204
    %v206 = vcvt.f32.s32 %v205
    %v207 = vcvt.f32.s32 %v201
    %v208 = vshll.u32 %v207, 16
    %v209 = vadd.s32 %v208, %v206
    %v210 = vand.u32 %v195, 65535
    %v211 = vshra.s32 %v195, 16
    %v212 = vcvt.s32.f32 %v210
    %v213 = vcvt.s32.f32 %v211
    %214 = vmin.xlane.f32.xlu0 %v213
    %v215 = vpop.xlane.xlu0 %214
    %vm216 = vcmp.eq.f32.partialorder %v213, %v215
    %v217 = vsel %vm216, %v212, inf
    %218 = vmin.xlane.f32.xlu0 %v217
    %v219 = vpop.xlane.xlu0 %218
    %v220 = vcvt.f32.s32 %v219
    %v221 = vcvt.f32.s32 %v215
    %v222 = vshll.u32 %v221, 16
    %v223 = vadd.s32 %v222, %v220
    %vm224 = vcmp.eq.s32.totalorder %v114, %v209
    %vm225 = vcmp.eq.s32.totalorder %v114, %v223
    %v226 = vsel %vm224, 1, 0
    %v227 = vsel %vm225, 1, 0
    %v228 = vcvt.s32.f32 %v226
    %v229 = vcvt.s32.f32 %v227
    %v230 = vsub.f32 %v107, %v189
    %v231 = vsub.f32 %v111, %v191
    %v232 = vmul.f32 %v230, 1.442695
    %v233 = vpow.pop %v232
    %v234 = vmul.f32 %v231, 1.442695
    %v235 = vpow.pop %v234
    %236 = vadd.xlane.f32.xlu0 %v233
    %v237 = vpop.xlane.xlu0 %236
    %238 = vadd.xlane.f32.xlu0 %v235
    %v239 = vpop.xlane.xlu0 %238
    %v240 = vrcp.pop %v237
    %v241 = vrcp.pop %v239
    %v242 = vmul.f32 %v233, %v240
    %v243 = vmul.f32 %v235, %v241
    %v244 = vadd.f32 %v228, %v229
    %v245 = vrot.slane %v244, 4
    %v246 = vadd.f32 %v244, %v245
    %v247 = vrot.slane %v246, 2
    %v248 = vadd.f32 %v246, %v247
    %v249 = vrot.slane %v248, 1
    %v250 = vadd.f32 %v248, %v249
    %251 = vst [vmem:[#allocation4 + $0x1] sm:$0x1] %v250
    %v252 = vadd.f32 %v242, %v243
    %v253 = vrot.slane %v252, 4
    %v254 = vadd.f32 %v252, %v253
    %v255 = vrot.slane %v254, 2
    %v256 = vadd.f32 %v254, %v255
    %v257 = vrot.slane %v256, 1
    %v258 = vadd.f32 %v256, %v257
    %259 = vst [vmem:[#allocation6 + $0x1] sm:$0x1] %v258
    %v260 = vpack.c.bf16 %v229, %v228
    %v261 = vld [vmem:[%s3] sm:$0xf]
    %v262 = vld [vmem:[%s3 + $0x4] sm:$0xf]
    %v263 = vld [vmem:[%s3 + $0x8] sm:$0xf]
    %v264 = vld [vmem:[%s3 + $0xc] sm:$0xf]
    %v265 = vld [vmem:[%s3 + $0x10] sm:$0xf]
    %v266 = vld [vmem:[%s3 + $0x14] sm:$0xf]
    %v267 = vld [vmem:[%s3 + $0x18] sm:$0xf]
    %v268 = vld [vmem:[%s3 + $0x1c] sm:$0xf]
    %v269 = vld [vmem:[%s3 + $0x20] sm:$0xf]
    %v270 = vld [vmem:[%s3 + $0x24] sm:$0xf]
    %v271 = vld [vmem:[%s3 + $0x28] sm:$0xf]
    %v272 = vld [vmem:[%s3 + $0x2c] sm:$0xf]
    %v273 = vld [vmem:[%s3 + $0x30] sm:$0xf]
    %v274 = vld [vmem:[%s3 + $0x34] sm:$0xf]
    %v275 = vld [vmem:[%s3 + $0x38] sm:$0xf]
    %v276 = vld [vmem:[%s3 + $0x3c] sm:$0xf]
    %v277 = vld [vmem:[%s3 + $0x40] sm:$0xf]
    %v278 = vld [vmem:[%s3 + $0x44] sm:$0xf]
    %v279 = vld [vmem:[%s3 + $0x48] sm:$0xf]
    %v280 = vld [vmem:[%s3 + $0x4c] sm:$0xf]
    %v281 = vld [vmem:[%s3 + $0x50] sm:$0xf]
    %v282 = vld [vmem:[%s3 + $0x54] sm:$0xf]
    %v283 = vld [vmem:[%s3 + $0x58] sm:$0xf]
    %v284 = vld [vmem:[%s3 + $0x5c] sm:$0xf]
    %v285 = vld [vmem:[%s3 + $0x60] sm:$0xf]
    %v286 = vld [vmem:[%s3 + $0x64] sm:$0xf]
    %v287 = vld [vmem:[%s3 + $0x68] sm:$0xf]
    %v288 = vld [vmem:[%s3 + $0x6c] sm:$0xf]
    %v289 = vld [vmem:[%s3 + $0x70] sm:$0xf]
    %v290 = vld [vmem:[%s3 + $0x74] sm:$0xf]
    %v291 = vld [vmem:[%s3 + $0x78] sm:$0xf]
    %v292 = vld [vmem:[%s3 + $0x7c] sm:$0xf]
    %v325 = vunpack.c.l.b16 %v261
    %v326 = vunpack.c.l.b16 %v262
    %v327 = vunpack.c.l.b16 %v263
    %v328 = vunpack.c.l.b16 %v264
    %v329 = vunpack.c.l.b16 %v265
    %v330 = vunpack.c.l.b16 %v266
    %v331 = vunpack.c.l.b16 %v267
    %v332 = vunpack.c.l.b16 %v268
    %v333 = vunpack.c.l.b16 %v269
    %v334 = vunpack.c.l.b16 %v270
    %v335 = vunpack.c.l.b16 %v271
    %v336 = vunpack.c.l.b16 %v272
    %v337 = vunpack.c.l.b16 %v273
    %v338 = vunpack.c.l.b16 %v274
    %v339 = vunpack.c.l.b16 %v275
    %v340 = vunpack.c.l.b16 %v276
    %v341 = vunpack.c.l.b16 %v277
    %v342 = vunpack.c.l.b16 %v278
    %v343 = vunpack.c.l.b16 %v279
    %v344 = vunpack.c.l.b16 %v280
    %v345 = vunpack.c.l.b16 %v281
    %v346 = vunpack.c.l.b16 %v282
    %v347 = vunpack.c.l.b16 %v283
    %v348 = vunpack.c.l.b16 %v284
    %v349 = vunpack.c.l.b16 %v285
    %v350 = vunpack.c.l.b16 %v286
    %v351 = vunpack.c.l.b16 %v287
    %v352 = vunpack.c.l.b16 %v288
    %v353 = vunpack.c.l.b16 %v289
    %v354 = vunpack.c.l.b16 %v290
    %v355 = vunpack.c.l.b16 %v291
    %v356 = vunpack.c.l.b16 %v292
    %v357 = vpack.c.b16 %v326, %v325
    %v358 = vpack.c.b16 %v328, %v327
    %v359 = vpack.c.b16 %v330, %v329
    %v360 = vpack.c.b16 %v332, %v331
    %v361 = vpack.c.b16 %v334, %v333
    %v362 = vpack.c.b16 %v336, %v335
    %v363 = vpack.c.b16 %v338, %v337
    %v364 = vpack.c.b16 %v340, %v339
    %v365 = vpack.c.b16 %v342, %v341
    %v366 = vpack.c.b16 %v344, %v343
    %v367 = vpack.c.b16 %v346, %v345
    %v368 = vpack.c.b16 %v348, %v347
    %v369 = vpack.c.b16 %v350, %v349
    %v370 = vpack.c.b16 %v352, %v351
    %v371 = vpack.c.b16 %v354, %v353
    %v372 = vpack.c.b16 %v356, %v355
    %389 = vmatprep.subr.bf16.mxu0 0
    %390 = vmatpush1.bf16.msra.mxu0 %v364
    %391 = vmatprep.subr.bf16.mxu0 0
    %392 = vmatpush1.bf16.msra.mxu0 %v363
    %393 = vmatprep.subr.bf16.mxu0 0
    %394 = vmatpush1.bf16.msra.mxu0 %v362
    %395 = vmatprep.subr.bf16.mxu0 0
    %396 = vmatpush1.bf16.msra.mxu0 %v361
    %397 = vmatprep.subr.bf16.mxu0 0
    %398 = vmatpush1.bf16.msra.mxu0 %v360
    %399 = vmatprep.subr.bf16.mxu0 0
    %400 = vmatpush1.bf16.msra.mxu0 %v359
    %401 = vmatprep.subr.bf16.mxu0 0
    %402 = vmatpush1.bf16.msra.mxu0 %v358
    %403 = vmatprep.subr.bf16.mxu0 0
    %404 = vmatpush1.bf16.msra.mxu0 %v357
    %405 = vmatprep.subr.bf16.mxu0 0
    %406 = vmatpush2.bf16.msra.mxu0 %v372
    %407 = vmatprep.subr.bf16.mxu0 0
    %408 = vmatpush2.bf16.msra.mxu0 %v371
    %409 = vmatprep.subr.bf16.mxu0 0
    %410 = vmatpush2.bf16.msra.mxu0 %v370
    %411 = vmatprep.subr.bf16.mxu0 0
    %412 = vmatpush2.bf16.msra.mxu0 %v369
    %413 = vmatprep.subr.bf16.mxu0 0
    %414 = vmatpush2.bf16.msra.mxu0 %v368
    %415 = vmatprep.subr.bf16.mxu0 0
    %416 = vmatpush2.bf16.msra.mxu0 %v367
    %417 = vmatprep.subr.bf16.mxu0 0
    %418 = vmatpush2.bf16.msra.mxu0 %v366
    %419 = vmatprep.subr.bf16.mxu0 0
    %420 = vmatpush2.bf16.msra.mxu0 %v365
    %421 = vmatprep.mubr.bf16.mxu0 %v260
    %422 = vmatmul.mubr.bf16.gmra.mxu0 %v187
    %v423 = vpop.f32.mrf.mxu0
    %v424 = vadd.f32 0.0, %v423
    %v425 = vpop.f32.mrf.mxu0
    %v426 = vpop.f32.mrf.mxu0
    %v427 = vadd.f32 0.0, %v426
    %v428 = vpop.f32.mrf.mxu0
    %429 = vdwg.mxu0
    %vm430 = vcmask 130048
    %431 = vst.msk [vmem:[#allocation2] sm:$0xff] %vm430, %v424
    %432 = vst.msk [vmem:[#allocation2 + $0x8] sm:$0xff] %vm430, %v427
    // Predicated region
    $region18: #{tpu_custom_call.1} parent=1 // pred_check
      _
    $region19: #{tpu_custom_call.1} parent=1 // pred_check_branch
      %434 = sbr.rel (0) target = $region21
    $region20: #{tpu_custom_call.1} parent=1 // pred_region
      %s436 = ssub.s32 256, 256
      %437 = vsyncadd [#allocation3], %s436
      %s438 = sshll.u32 [#allocation2], 4
      %s439 = int_to_ptr.vmem [resolvable:$true] %s438
      %444 = dma.vmem_to_hbm [thread:$0]  %s439, 256, %s4, [#allocation3], 128, 128, 8
    $region21: #{tpu_custom_call.1} parent=1 // pred_fallthru
      _
    // Predicated region
    $region22: #{tpu_custom_call.1} parent=1 // pred_check
      _
    $region23: #{tpu_custom_call.1} parent=1 // pred_check_branch
      %446 = sbr.rel (0) target = $region25
    $region24: #{tpu_custom_call.1} parent=1 // pred_region
      %s448 = ssub.s32 32, 32
      %449 = vsyncadd [#allocation5], %s448
      %s451 = sshll.u32 [#allocation4], 4
      %s452 = int_to_ptr.vmem [resolvable:$true] %s451
      %454 = dma.vmem_to_hbm [thread:$0]  %s452, 32, %s5, [#allocation5]
    $region25: #{tpu_custom_call.1} parent=1 // pred_fallthru
      _
    // Predicated region
    $region26: #{tpu_custom_call.1} parent=1 // pred_check
      _
    $region27: #{tpu_custom_call.1} parent=1 // pred_check_branch
      %456 = sbr.rel (0) target = $region29
    $region28: #{tpu_custom_call.1} parent=1 // pred_region
      %s458 = ssub.s32 32, 32
      %459 = vsyncadd [#allocation5], %s458
      %s461 = sshll.u32 [#allocation6], 4
      %s462 = int_to_ptr.vmem [resolvable:$true] %s461
      %464 = dma.vmem_to_hbm [thread:$0]  %s462, 32, %s6, [#allocation5]
    $region29: #{tpu_custom_call.1} parent=1 // pred_fallthru
      _
    // Predicated region
    $region30: #{tpu_custom_call.1} parent=1 // pred_check
      _
    $region31: #{tpu_custom_call.1} parent=1 // pred_check_branch
      %466 = sbr.rel (0) target = $region33
    $region32: #{tpu_custom_call.1} parent=1 // pred_region
      %467 = dma.done [#allocation3], 256
    $region33: #{tpu_custom_call.1} parent=1 // pred_fallthru
      _
    // Predicated region
    $region34: #{tpu_custom_call.1} parent=1 // pred_check
      _
    $region35: #{tpu_custom_call.1} parent=1 // pred_check_branch
      %469 = sbr.rel (0) target = $region37
    $region36: #{tpu_custom_call.1} parent=1 // pred_region
      %470 = dma.done [#allocation5], 32
    $region37: #{tpu_custom_call.1} parent=1 // pred_fallthru
      _
    // Predicated region
    $region38: #{tpu_custom_call.1} parent=1 // pred_check
      _
    $region39: #{tpu_custom_call.1} parent=1 // pred_check_branch
      %472 = sbr.rel (0) target = $region41
    $region40: #{tpu_custom_call.1} parent=1 // pred_region
      %473 = dma.done [#allocation5], 32
    $region41: #{tpu_custom_call.1} parent=1 // pred_fallthru
      _
    %474 = vsyncpa [#allocation3], 1
    %475 = vsyncpa [#allocation5], 1

</llo_original>
